<compile_context>
chip_gen: v5e
topology: v5e:2x2
jax: 0.10.0
libtpu: 0.0.40
codegen_flags: <defaults>
</compile_context>

<pallas_src>
import functools

import jax
import jax.numpy as jnp
from jax import lax
from jax.experimental import pallas as pl
from jax.experimental.pallas import tpu as pltpu


def _round_up(x, m):
    return (x + m - 1) // m * m


def _focal_loss_kernel(alpha_ref, x_ref, t_ref, out_ref, acc_ref, *,
                       gamma, gamma_int, hw, tile, mask_tail):
    i = pl.program_id(1)

    @pl.when(i == 0)
    def _init():
        acc_ref[...] = jnp.zeros_like(acc_ref)

    x = x_ref[...].astype(jnp.float32)          # (C, tile) logits
    t = t_ref[...]                              # (1, tile) int32 targets

    # log-softmax pieces over the class (sublane) axis — single exp pass.
    m = jnp.max(x, axis=0, keepdims=True)                    # (1, tile)
    shifted = x - m                                          # (C, tile)
    s = jnp.sum(jnp.exp(shifted), axis=0, keepdims=True)     # (1, tile)
    lse = jnp.log(s)                                         # (1, tile)

    # One-hot gather of the target class via iota compare (no dynamic gather).
    onehot = (lax.broadcasted_iota(jnp.int32, x.shape, 0) == t)
    onehot_f = onehot.astype(jnp.float32)

    x_t = jnp.sum(shifted * onehot_f, axis=0, keepdims=True)  # target logit - max
    log_pt = x_t - lse                                        # log softmax[target]
    p_t = jnp.exp(log_pt)                                     # softmax[target]
    alpha_t = jnp.sum(alpha_ref[...].astype(jnp.float32) * onehot_f,
                      axis=0, keepdims=True)                  # (1, tile)

    # probs = F.nll_loss(P, t) = -P_t  =>  (1 - probs) = (1 + P_t)
    # (faithfully reproduces the original module's behavior)
    base = 1.0 + p_t
    if gamma_int is not None:
        mod = jnp.ones_like(base)
        for _ in range(gamma_int):          # integer gamma: plain VPU multiplies
            mod = mod * base
    else:
        mod = base ** gamma                 # non-integer gamma: fall back to pow
    loss_lane = -alpha_t * mod * log_pt     # (1, tile)

    if mask_tail:
        cols = i * tile + lax.broadcasted_iota(jnp.int32, (1, tile), 1)
        loss_lane = jnp.where(cols < hw, loss_lane, 0.0)

    acc_ref[...] += loss_lane               # element-wise accumulate, no XLU

    @pl.when(i == pl.num_programs(1) - 1)
    def _finalize():
        total = jnp.sum(acc_ref[...])       # single cross-lane reduce per batch
        out_ref[...] = jnp.zeros_like(out_ref) + total   # lane-dense (1,128) store


def focal_loss_pallas(inputs, targets, alpha, gamma=2.0, size_average=True,
                      tile_n=2048):
    """inputs: (B, C, H, W) logits (f32 or bf16); targets: (B, H, W) class ids."""
    B, C, H, W = inputs.shape
    HW = H * W
    N = B * HW

    in_itemsize = jnp.dtype(inputs.dtype).itemsize

    # Tile: multiple of 128 lanes, no wider than the (rounded) spatial extent,
    # capped so the double-buffered working set fits comfortably in VMEM.
    vmem_budget = 8 * 1024 * 1024
    bytes_per_lane = 2 * C * in_itemsize + 2 * 4 + 4   # 2x logits, 2x int32 tgt, acc
    max_tile_vmem = max(128, (vmem_budget // bytes_per_lane) // 128 * 128)
    tile = min(max(128, int(tile_n) // 128 * 128),
               _round_up(HW, 128),
               max_tile_vmem)

    HW_pad = _round_up(HW, tile)
    n_tiles = HW_pad // tile
    mask_tail = HW_pad != HW

    # Free reshapes only: no transpose => no extra HBM pass over the logits.
    # Logits are passed in their original dtype (bf16 halves HBM read traffic);
    # the kernel upcasts to f32 internally.
    x = inputs.reshape(B, C, HW)
    t = targets.reshape(B, 1, HW).astype(jnp.int32)
    if mask_tail:
        pad = HW_pad - HW
        x = jnp.pad(x, ((0, 0), (0, 0), (0, pad)))
        t = jnp.pad(t, ((0, 0), (0, 0), (0, pad)))
    alpha_c1 = jnp.asarray(alpha, jnp.float32).reshape(C, 1)

    g = float(gamma)
    gamma_int = int(g) if (g.is_integer() and 0.0 <= g <= 8.0) else None

    kernel = functools.partial(
        _focal_loss_kernel, gamma=g, gamma_int=gamma_int, hw=HW, tile=tile,
        mask_tail=mask_tail)

    # Raise the scoped-VMEM limit only when the working set needs it
    # (matters on v5e where the default scoped VMEM is 16 MiB).
    vmem_need = 2 * (C * tile * in_itemsize + tile * 4 + C * 4 + 128 * 4) + tile * 4
    cp_kwargs = dict(dimension_semantics=("parallel", "arbitrary"))
    if vmem_need > 12 * 1024 * 1024:
        cp_kwargs["vmem_limit_bytes"] = min(int(2 * vmem_need), 48 * 1024 * 1024)

    partials = pl.pallas_call(
        kernel,
        out_shape=jax.ShapeDtypeStruct((B, 1, 128), jnp.float32),
        grid_spec=pltpu.PrefetchScalarGridSpec(
            num_scalar_prefetch=0,
            grid=(B, n_tiles),
            in_specs=[
                pl.BlockSpec((C, 1), lambda b, i: (0, 0)),               # alpha
                pl.BlockSpec((None, C, tile), lambda b, i: (b, 0, i)),   # logits
                pl.BlockSpec((None, 1, tile), lambda b, i: (b, 0, i)),   # targets
            ],
            out_specs=pl.BlockSpec((None, 1, 128), lambda b, i: (b, 0, 0)),
            scratch_shapes=[pltpu.VMEM((1, tile), jnp.float32)],
        ),
        compiler_params=pltpu.CompilerParams(**cp_kwargs),
    )(alpha_c1, x, t)

    loss = jnp.sum(partials[:, 0, 0])          # tiny (B,) reduction on host side
    if size_average:
        loss = loss / jnp.float32(N)
    return loss


def focal_loss_ref(inputs, targets, alpha, gamma=2.0, size_average=True):
    """Pure-JAX reference mirroring the PyTorch forward exactly."""
    B, C, H, W = inputs.shape
    xf = jnp.transpose(inputs, (0, 2, 3, 1)).reshape(-1, C).astype(jnp.float32)
    tf = targets.reshape(-1).astype(jnp.int32)
    logp = jax.nn.log_softmax(xf, axis=-1)
    p = jax.nn.softmax(xf, axis=-1)
    log_pt = jnp.take_along_axis(logp, tf[:, None], axis=-1)[:, 0]
    p_t = jnp.take_along_axis(p, tf[:, None], axis=-1)[:, 0]
    alpha_t = alpha.reshape(-1)[tf]
    probs = -p_t                                   # nll_loss on probabilities
    batch_loss = -alpha_t * (1.0 - probs) ** gamma * log_pt
    return batch_loss.mean() if size_average else batch_loss.sum()


if __name__ == "__main__":
    B, C, H, W = 2, 4, 16, 16
    gamma = 2.0

    key = jax.random.PRNGKey(0)
    kx, kt = jax.random.split(key)
    x = jax.random.normal(kx, (B, C, H, W), dtype=jnp.float32)
    targets = jax.random.randint(kt, (B, H, W), 0, C, dtype=jnp.int32)

    # FocalLoss.__init__(class_num=C) parameter: alpha of shape (C, 1).
    alpha = jnp.linspace(0.5, 1.5, C, dtype=jnp.float32).reshape(C, 1)

    loss = focal_loss_pallas(x, targets, alpha, gamma=gamma, size_average=True)
    loss = jax.block_until_ready(loss)

    ref = focal_loss_ref(x, targets, alpha, gamma=gamma, size_average=True)
    assert jnp.allclose(loss, ref, rtol=2e-5, atol=1e-6), (loss, ref)

    print("KERNEL_OK")
</pallas_src>

<mosaic_0001>
module attributes {stable_mosaic.version = 11 : i64} {
  func.func @_focal_loss_kernel(%arg0: i32, %arg1: i32, %arg2: memref<4x1xf32, #tpu.memory_space<vmem>>, %arg3: memref<1x4x256xf32, #tpu.memory_space<vmem>>, %arg4: memref<1x1x256xi32, #tpu.memory_space<vmem>>, %arg5: memref<1x1x128xf32, #tpu.memory_space<vmem>>, %arg6: memref<1x256xf32, #tpu.memory_space<vmem>>) attributes {dimension_semantics = [#tpu.dimension_semantics<parallel>, #tpu.dimension_semantics<arbitrary>], iteration_bounds = array<i64: 2, 1>, scalar_prefetch = 0 : i64, scratch_operands = 1 : i64, tpu.core_type = #tpu.core_type<tc>, window_params = [{pipeline_mode = #tpu.pipeline_mode<synchronous>, transform_indices = @transform_0, window_bounds = array<i64: 4, 1>}, {transform_indices = @transform_1, window_bounds = array<i64: 1, 4, 256>}, {transform_indices = @transform_2, window_bounds = array<i64: 1, 1, 256>}, {transform_indices = @transform_3, window_bounds = array<i64: 1, 1, 128>}]} {
    %c0_i32 = arith.constant 0 : i32
    %0 = arith.cmpi eq, %arg1, %c0_i32 : i32
    %1 = arith.extui %0 : i1 to i32
    %c0_i32_0 = arith.constant 0 : i32
    %2 = arith.cmpi ne, %1, %c0_i32_0 : i32
    scf.if %2 {
      %cst_20 = arith.constant 0.000000e+00 : f32
      %45 = vector.broadcast %cst_20 : f32 to vector<1x256xf32>
      %c0_21 = arith.constant 0 : index
      %c0_22 = arith.constant 0 : index
      %46 = vector.load %arg6[%c0_21, %c0_22] : memref<1x256xf32, #tpu.memory_space<vmem>>, vector<1x256xf32>
      tpu.vector_store %arg6[%c0_21, %c0_22], %45 {strides = array<i32>} : memref<1x256xf32, #tpu.memory_space<vmem>>, vector<1x256xf32>,
    } else {
    }
    %c0 = arith.constant 0 : index
    %c0_1 = arith.constant 0 : index
    %c0_2 = arith.constant 0 : index
    %3 = vector.load %arg3[%c0, %c0_1, %c0_2] : memref<1x4x256xf32, #tpu.memory_space<vmem>>, vector<1x4x256xf32>
    %4 = vector.shape_cast %3 : vector<1x4x256xf32> to vector<4x256xf32>
    %c0_3 = arith.constant 0 : index
    %c0_4 = arith.constant 0 : index
    %c0_5 = arith.constant 0 : index
    %5 = vector.load %arg4[%c0_3, %c0_4, %c0_5] : memref<1x1x256xi32, #tpu.memory_space<vmem>>, vector<1x1x256xi32>
    %6 = vector.shape_cast %5 : vector<1x1x256xi32> to vector<1x256xi32>
    %cst = arith.constant dense<0xFF800000> : vector<256xf32>
    %7 = vector.multi_reduction <maximumf>, %4, %cst [0] : vector<4x256xf32> to vector<256xf32>
    %8 = vector.shape_cast %7 : vector<256xf32> to vector<1x256xf32>
    %9 = vector.broadcast %8 : vector<1x256xf32> to vector<4x256xf32>
    %10 = arith.subf %4, %9 : vector<4x256xf32>
    %11 = math.exp %10 : vector<4x256xf32>
    %cst_6 = arith.constant dense<0.000000e+00> : vector<256xf32>
    %12 = vector.multi_reduction <add>, %11, %cst_6 [0] : vector<4x256xf32> to vector<256xf32>
    %13 = vector.shape_cast %12 : vector<256xf32> to vector<1x256xf32>
    %14 = math.log %13 : vector<1x256xf32>
    %15 = tpu.iota {dimensions = array<i32: 0>} : vector<4x256xi32>
    %16 = vector.broadcast %6 : vector<1x256xi32> to vector<4x256xi32>
    %17 = arith.cmpi eq, %15, %16 : vector<4x256xi32>
    %18 = arith.extui %17 : vector<4x256xi1> to vector<4x256xi32>
    %19 = arith.sitofp %18 : vector<4x256xi32> to vector<4x256xf32>
    %20 = arith.mulf %10, %19 : vector<4x256xf32>
    %cst_7 = arith.constant dense<0.000000e+00> : vector<256xf32>
    %21 = vector.multi_reduction <add>, %20, %cst_7 [0] : vector<4x256xf32> to vector<256xf32>
    %22 = vector.shape_cast %21 : vector<256xf32> to vector<1x256xf32>
    %23 = arith.subf %22, %14 : vector<1x256xf32>
    %24 = math.exp %23 : vector<1x256xf32>
    %c0_8 = arith.constant 0 : index
    %c0_9 = arith.constant 0 : index
    %25 = vector.load %arg2[%c0_8, %c0_9] : memref<4x1xf32, #tpu.memory_space<vmem>>, vector<4x1xf32>
    %26 = vector.broadcast %25 : vector<4x1xf32> to vector<4x256xf32>
    %27 = arith.mulf %26, %19 : vector<4x256xf32>
    %cst_10 = arith.constant dense<0.000000e+00> : vector<256xf32>
    %28 = vector.multi_reduction <add>, %27, %cst_10 [0] : vector<4x256xf32> to vector<256xf32>
    %29 = vector.shape_cast %28 : vector<256xf32> to vector<1x256xf32>
    %cst_11 = arith.constant 1.000000e+00 : f32
    %30 = vector.broadcast %cst_11 : f32 to vector<1x256xf32>
    %31 = arith.addf %30, %24 : vector<1x256xf32>
    %cst_12 = arith.constant 1.000000e+00 : f32
    %32 = vector.broadcast %cst_12 : f32 to vector<1x256xf32>
    %33 = arith.mulf %32, %31 : vector<1x256xf32>
    %34 = arith.mulf %33, %31 : vector<1x256xf32>
    %cst_13 = arith.constant 0.000000e+00 : f32
    %35 = vector.broadcast %cst_13 : f32 to vector<1x256xf32>
    %36 = arith.subf %35, %29 : vector<1x256xf32>
    %37 = arith.mulf %36, %34 : vector<1x256xf32>
    %38 = arith.mulf %37, %23 : vector<1x256xf32>
    %c0_14 = arith.constant 0 : index
    %c0_15 = arith.constant 0 : index
    %39 = vector.load %arg6[%c0_14, %c0_15] : memref<1x256xf32, #tpu.memory_space<vmem>>, vector<1x256xf32>
    %40 = arith.addf %39, %38 : vector<1x256xf32>
    %c0_16 = arith.constant 0 : index
    %c0_17 = arith.constant 0 : index
    %41 = vector.load %arg6[%c0_16, %c0_17] : memref<1x256xf32, #tpu.memory_space<vmem>>, vector<1x256xf32>
    tpu.vector_store %arg6[%c0_16, %c0_17], %40 {strides = array<i32>} : memref<1x256xf32, #tpu.memory_space<vmem>>, vector<1x256xf32>,
    %c0_i32_18 = arith.constant 0 : i32
    %42 = arith.cmpi eq, %arg1, %c0_i32_18 : i32
    %43 = arith.extui %42 : i1 to i32
    %c0_i32_19 = arith.constant 0 : i32
    %44 = arith.cmpi ne, %43, %c0_i32_19 : i32
    scf.if %44 {
      %c0_20 = arith.constant 0 : index
      %c0_21 = arith.constant 0 : index
      %45 = vector.load %arg6[%c0_20, %c0_21] : memref<1x256xf32, #tpu.memory_space<vmem>>, vector<1x256xf32>
      %46 = vector.shape_cast %45 : vector<1x256xf32> to vector<1x1x256xf32>
      %cst_22 = arith.constant dense<0.000000e+00> : vector<1xf32>
      %47 = vector.multi_reduction <add>, %46, %cst_22 [1, 2] : vector<1x1x256xf32> to vector<1xf32>
      %48 = vector.shape_cast %47 : vector<1xf32> to vector<1x1x1xf32>
      %49 = vector.extract %48[0, 0, 0] : f32 from vector<1x1x1xf32>
      %cst_23 = arith.constant 0.000000e+00 : f32
      %50 = vector.broadcast %cst_23 : f32 to vector<1x128xf32>
      %51 = vector.broadcast %49 : f32 to vector<1x128xf32>
      %52 = arith.addf %50, %51 : vector<1x128xf32>
      %c0_24 = arith.constant 0 : index
      %c0_25 = arith.constant 0 : index
      %c0_26 = arith.constant 0 : index
      %53 = vector.load %arg5[%c0_24, %c0_25, %c0_26] : memref<1x1x128xf32, #tpu.memory_space<vmem>>, vector<1x1x128xf32>
      %54 = vector.shape_cast %53 : vector<1x1x128xf32> to vector<1x128xf32>
      %55 = vector.shape_cast %52 : vector<1x128xf32> to vector<1x1x128xf32>
      tpu.vector_store %arg5[%c0_24, %c0_25, %c0_26], %55 {strides = array<i32>} : memref<1x1x128xf32, #tpu.memory_space<vmem>>, vector<1x1x128xf32>,
    } else {
    }
    return
  }
  func.func @transform_0(%arg0: i32, %arg1: i32) -> (i32, i32) {
    %c0_i32 = arith.constant 0 : i32
    %c0_i32_0 = arith.constant 0 : i32
    %c0_i32_1 = arith.constant 0 : i32
    return %c0_i32, %c0_i32_0 : i32, i32
  }
  func.func @transform_1(%arg0: i32, %arg1: i32) -> (i32, i32, i32) {
    %c0_i32 = arith.constant 0 : i32
    %c0_i32_0 = arith.constant 0 : i32
    return %arg0, %c0_i32, %arg1 : i32, i32, i32
  }
  func.func @transform_2(%arg0: i32, %arg1: i32) -> (i32, i32, i32) {
    %c0_i32 = arith.constant 0 : i32
    %c0_i32_0 = arith.constant 0 : i32
    return %arg0, %c0_i32, %arg1 : i32, i32, i32
  }
  func.func @transform_3(%arg0: i32, %arg1: i32) -> (i32, i32, i32) {
    %c0_i32 = arith.constant 0 : i32
    %c0_i32_0 = arith.constant 0 : i32
    %c0_i32_1 = arith.constant 0 : i32
    return %arg0, %c0_i32, %c0_i32_0 : i32, i32, i32
  }
}

</mosaic_0001>

<llo_original>
// kernel: tpu_custom_call.1
$region0: #{tpu_custom_call.1}
  #allocation0 [shape = 'u32[]', space=smem, size = 0x4, offset = 0x4, fixed_abs, tag = 'smem constant byte address 0x4 - core index']
  #allocation1 [shape = 'u32[72,128]{1,0:T(1,128)}', space=vmem, size = 0x9000, scoped, tag = 'internal scratch']
  #allocation2 [shape = 'f32[1,256]{1,0:T(1,128)}', space=vmem, size = 0x400, scoped, tag = 'scratch operand']
  %s0 = inlined_call_operand.vmem [shape: f32[4,1], index: 0, kind: input, shape index: {}]
  %s1 = inlined_call_operand.hbm [shape: f32[2,4,256], index: 1, kind: input, shape index: {}]
  %s2 = inlined_call_operand.vmem [shape: s32[2,1,256], index: 2, kind: input, shape index: {}]
  %s3 = inlined_call_operand.hbm [shape: f32[2,1,128], index: 3, kind: output, shape index: {}]
  %s4 = sld [smem:[#allocation0]]
  $region57: #{tpu_custom_call.1} parent=0
    _
  %s6 = ssub.s32 1, %s4
  %s7 = scalar_select 0, %s6, %s4
  $region1: #{tpu_custom_call.1} parent=0
    #allocation3 [shape = 'u8[8192]{0}', space=vmem, size = 0x2000, scoped, tag = 'input window, operand 1']
    #allocation4 [shape = 's32[2]{0}', space=sflag, size = 0x8, scoped, tag = 'scoped memory for tpu_custom_call.1']
    #allocation5 [shape = 's32[2]{0}', space=sflag, size = 0x8, scoped, tag = 'scoped memory for tpu_custom_call.1']
    #allocation6 [shape = 'u8[1024]{0}', space=vmem, size = 0x400, scoped, tag = 'output window, operand 0']
    %8 = vsyncpa [#allocation4], 0
    %s9 = scalar_lea.sflag [#allocation4], 1
    %10 = vsyncpa %s9, 0
    %11 = vsyncpa [#allocation5], 0
    %s12 = scalar_lea.sflag [#allocation5], 1
    %13 = vsyncpa %s12, 0
    loop: start=0, step=1, limit=4
    $region2: #{tpu_custom_call.1} parent=1 // loop_pre_header
      _
    $region3: #{tpu_custom_call.1} parent=1 // loop_header
      %s15 = sphi 0, %s19
      %p16 = scmp.ge.s32.totalorder %s15, 4
      %s22 = sphi 0, %s34
      %s23 = sphi 0, %s30
      %s24 = sphi 0, %s22
      %s25 = sphi 0, %s23
      %s26 = sphi 0, %s24
      %s27 = sphi 0, %s25
      %s35 = sphi 0, %s35
      %s37 = sphi 0, %s35
      %s38 = sphi 0, %s37
      %s52 = sphi 0, %s38
      %s60 = sphi 0, %s62
      %s63 = sphi 0, %s60
      %s64 = sphi 0, %s63
      %s80 = sphi 0, %s64
      %s88 = sphi 0, %s90
      %s91 = sphi 0, %s88
      %s92 = sphi 0, %s91
      %s108 = sphi 0, %s92
      %s114 = sphi 0, %s116
      %s117 = sphi 0, %s114
      %s118 = sphi 0, %s117
      %s134 = sphi 0, %s118
    $region4: #{tpu_custom_call.1} parent=1 // loop_header_branch
      %18 = sbr.rel (%p16) target = $region8
    $region5: #{tpu_custom_call.1} parent=1 // loop_body
      %s20 = ssub.s32 %s15, 1
      %s21 = ssub.s32 %s15, 2
      %s28 = sadd.s32 1, %s23
      %p29 = scmp.ge.s32.totalorder %s28, 1
      %s30 = scalar_select %p29, 0, %s28
      %s31 = sadd.s32 1, %s22
      %s32 = scalar_select %p29, %s31, %s22
      %p33 = scmp.ge.s32.totalorder %s32, 2
      %s34 = scalar_select %p33, 0, %s32
      %s36 = sadd.s32 %s35, 1
      %p39 = scmp.eq.s32.totalorder %s15, 1
      %p40 = scmp.ne.s32.totalorder %s35, %s37
      %p41 = scmp.eq.s32.totalorder %s15, 0
      %p42 = por %p40, %p41
      %p43 = scmp.ne.s32.totalorder %s35, %s37
      %p44 = scmp.eq.s32.totalorder %s20, 1
      %p45 = por %p43, %p44
      %p46 = scmp.ne.s32.totalorder %s37, %s38
      %p47 = scmp.eq.s32.totalorder %s20, 0
      %p48 = por %p46, %p47
      %p49 = scmp.ne.s32.totalorder %s37, %s38
      %p50 = scmp.eq.s32.totalorder %s21, 1
      %p51 = por %p49, %p50
      %p53 = scmp.ne.s32.totalorder %s38, %s52
      %p54 = scmp.eq.s32.totalorder %s21, 0
      %p55 = por %p53, %p54
      %s56 = ssub.s32 %s22, %s34
      %s57 = ssub.s32 %s23, %s30
      %s58 = sor.u32 %s56, %s57
      %p59 = scmp.eq.s32.totalorder %s58, 0
      %s61 = sadd.s32 %s60, 1
      %s62 = scalar_select %p59, %s60, %s61
      %p65 = pneg %p59
      %p66 = scmp.eq.s32.totalorder %s15, 1
      %p67 = por %p65, %p66
      %p68 = scmp.ne.s32.totalorder %s60, %s63
      %p69 = scmp.eq.s32.totalorder %s15, 0
      %p70 = por %p68, %p69
      %p71 = scmp.ne.s32.totalorder %s60, %s63
      %p72 = scmp.eq.s32.totalorder %s20, 1
      %p73 = por %p71, %p72
      %p74 = scmp.ne.s32.totalorder %s63, %s64
      %p75 = scmp.eq.s32.totalorder %s20, 0
      %p76 = por %p74, %p75
      %p77 = scmp.ne.s32.totalorder %s63, %s64
      %p78 = scmp.eq.s32.totalorder %s21, 1
      %p79 = por %p77, %p78
      %p81 = scmp.ne.s32.totalorder %s64, %s80
      %p82 = scmp.eq.s32.totalorder %s21, 0
      %p83 = por %p81, %p82
      %s84 = ssub.s32 %s22, %s34
      %s85 = ssub.s32 %s23, %s30
      %s86 = sor.u32 %s84, %s85
      %p87 = scmp.eq.s32.totalorder %s86, 0
      %s89 = sadd.s32 %s88, 1
      %s90 = scalar_select %p87, %s88, %s89
      %p93 = pneg %p87
      %p94 = scmp.eq.s32.totalorder %s15, 1
      %p95 = por %p93, %p94
      %p96 = scmp.ne.s32.totalorder %s88, %s91
      %p97 = scmp.eq.s32.totalorder %s15, 0
      %p98 = por %p96, %p97
      %p99 = scmp.ne.s32.totalorder %s88, %s91
      %p100 = scmp.eq.s32.totalorder %s20, 1
      %p101 = por %p99, %p100
      %p102 = scmp.ne.s32.totalorder %s91, %s92
      %p103 = scmp.eq.s32.totalorder %s20, 0
      %p104 = por %p102, %p103
      %p105 = scmp.ne.s32.totalorder %s91, %s92
      %p106 = scmp.eq.s32.totalorder %s21, 1
      %p107 = por %p105, %p106
      %p109 = scmp.ne.s32.totalorder %s92, %s108
      %p110 = scmp.eq.s32.totalorder %s21, 0
      %p111 = por %p109, %p110
      %s112 = ssub.s32 %s22, %s34
      %p113 = scmp.eq.s32.totalorder %s112, 0
      %s115 = sadd.s32 %s114, 1
      %s116 = scalar_select %p113, %s114, %s115
      %p119 = pneg %p113
      %p120 = scmp.eq.s32.totalorder %s15, 1
      %p121 = por %p119, %p120
      %p122 = scmp.ne.s32.totalorder %s114, %s117
      %p123 = scmp.eq.s32.totalorder %s15, 0
      %p124 = por %p122, %p123
      %p125 = scmp.ne.s32.totalorder %s114, %s117
      %p126 = scmp.eq.s32.totalorder %s20, 1
      %p127 = por %p125, %p126
      %p128 = scmp.ne.s32.totalorder %s117, %s118
      %p129 = scmp.eq.s32.totalorder %s20, 0
      %p130 = por %p128, %p129
      %p131 = scmp.ne.s32.totalorder %s117, %s118
      %p132 = scmp.eq.s32.totalorder %s21, 1
      %p133 = por %p131, %p132
      %p135 = scmp.ne.s32.totalorder %s118, %s134
      %p136 = scmp.eq.s32.totalorder %s21, 0
      %p137 = por %p135, %p136
      %p138 = scmp.le.s32.totalorder 1, %s15
      %p139 = scmp.lt.s32.totalorder %s15, 3
      %p140 = pnand %p138, %p139
      %p141 = pneg %p140
      // Predicated region
      $region9: #{tpu_custom_call.1} parent=5 // pred_check
        _
      $region10: #{tpu_custom_call.1} parent=5 // pred_check_branch
        %143 = sbr.rel (%p140) target = $region12
      $region11: #{tpu_custom_call.1} parent=5 // pred_region
        %s144 = ssub.s32 %s15, 1
        // Predicated region
        $region13: #{tpu_custom_call.1} parent=11 // pred_check
          %p145 = pneg %p48
        $region14: #{tpu_custom_call.1} parent=11 // pred_check_branch
          %147 = sbr.rel (%p145) target = $region16
        $region15: #{tpu_custom_call.1} parent=11 // pred_region
          _
        $region16: #{tpu_custom_call.1} parent=11 // pred_fallthru
          _
      $region12: #{tpu_custom_call.1} parent=5 // pred_fallthru
        _
      %p148 = scmp.lt.s32.totalorder %s15, 2
      // Predicated region
      $region17: #{tpu_custom_call.1} parent=5 // pred_check
        %p149 = pneg %p148
      $region18: #{tpu_custom_call.1} parent=5 // pred_check_branch
        %151 = sbr.rel (%p149) target = $region20
      $region19: #{tpu_custom_call.1} parent=5 // pred_region
        // Predicated region
        $region21: #{tpu_custom_call.1} parent=19 // pred_check
          %p152 = pneg %p70
        $region22: #{tpu_custom_call.1} parent=19 // pred_check_branch
          %154 = sbr.rel (%p152) target = $region24
        $region23: #{tpu_custom_call.1} parent=19 // pred_region
          %s155 = sand.u32 %s60, 1
          %s156 = scalar_lea.sflag [#allocation4], %s155
          %s157 = sand.u32 %s60, 1
          %s158 = smul.addr %s157, 8
          %s159 = scalar_lea.vmem [#allocation3], %s158
          %s160 = smul.u32 2, %s23
          %162 = vsyncadd %s156, 0
          %s163 = smul.addr %s22, 2
          %s164 = sadd.s32 %s160, %s163
          %s165 = smul.addr %s164, 4
          %s166 = scalar_lea.hbm %s1, %s165
          %s168 = sshll.u32 %s166, 4
          %s169 = int_to_ptr.hbm [resolvable:$true] %s168
          %s170 = sshll.u32 %s159, 4
          %s171 = int_to_ptr.vmem [resolvable:$true] %s170
          %173 = dma.hbm_to_vmem [thread:$0]  %s169, 128, %s171, %s156
        $region24: #{tpu_custom_call.1} parent=19 // pred_fallthru
          _
        // Predicated region
        $region25: #{tpu_custom_call.1} parent=19 // pred_check
          %p174 = pneg %p98
        $region26: #{tpu_custom_call.1} parent=19 // pred_check_branch
          %176 = sbr.rel (%p174) target = $region28
        $region27: #{tpu_custom_call.1} parent=19 // pred_region
          %s177 = smul.u32 2, %s23
          %p178 = scmp.lt.s32.totalorder %s22, 1
          %s179 = scalar_select %p178, %s22, 1
          %p180 = scmp.lt.s32.totalorder %s177, 1
          %s181 = scalar_select %p180, %s177, 1
          %s182 = smul.addr %s179, 2
          %s183 = sadd.s32 %s181, %s182
          %s184 = scalar_lea.vmem %s2, %s183
          %s185 = smul.u32 2, %s23
        $region28: #{tpu_custom_call.1} parent=19 // pred_fallthru
          _
      $region20: #{tpu_custom_call.1} parent=5 // pred_fallthru
        _
      %p186 = scmp.le.s32.totalorder 1, %s15
      %p187 = scmp.lt.s32.totalorder %s15, 3
      %p188 = pnand %p186, %p187
      %p189 = pneg %p188
      // Predicated region
      $region29: #{tpu_custom_call.1} parent=5 // pred_check
        _
      $region30: #{tpu_custom_call.1} parent=5 // pred_check_branch
        %191 = sbr.rel (%p188) target = $region32
      $region31: #{tpu_custom_call.1} parent=5 // pred_region
        %s192 = ssub.s32 %s15, 1
        %s193 = sand.u32 %s63, 1
        %s194 = scalar_lea.sflag [#allocation4], %s193
        %s195 = sand.u32 %s63, 1
        %s196 = smul.addr %s195, 8
        %s197 = scalar_lea.vmem [#allocation3], %s196
        // Predicated region
        $region33: #{tpu_custom_call.1} parent=31 // pred_check
          %p198 = pneg %p76
        $region34: #{tpu_custom_call.1} parent=31 // pred_check_branch
          %200 = sbr.rel (%p198) target = $region36
        $region35: #{tpu_custom_call.1} parent=31 // pred_region
          %202 = dma.done %s194, 128
        $region36: #{tpu_custom_call.1} parent=31 // pred_fallthru
          _
        %p203 = pneg %p48
        %p204 = pneg %p45
        %s205 = sand.u32 %s63, 1
        %s206 = scalar_lea.sflag [#allocation4], %s205
        %s207 = sand.u32 %s63, 1
        %s208 = smul.addr %s207, 8
        %s209 = scalar_lea.vmem [#allocation3], %s208
        %p210 = pneg %p76
        %p211 = pneg %p73
        %s212 = smul.u32 2, %s25
        %p213 = scmp.lt.s32.totalorder %s24, 1
        %s214 = scalar_select %p213, %s24, 1
        %p215 = scmp.lt.s32.totalorder %s212, 1
        %s216 = scalar_select %p215, %s212, 1
        %s217 = smul.addr %s214, 2
        %s218 = sadd.s32 %s216, %s217
        %s219 = scalar_lea.vmem %s2, %s218
        %p220 = pneg %p104
        %p221 = pneg %p101
        %p222 = pneg %p130
        %p223 = pneg %p127
        %s224 = sand.u32 %s117, 1
        %s225 = scalar_lea.sflag [#allocation5], %s224
        %s226 = sand.u32 %s117, 1
        %s227 = scalar_lea.vmem [#allocation6], %s226
        %s228 = smul.u32 2, %s25
        %s229 = smul.u32 2, %s25
        %p230 = scmp.lt.s32.totalorder %s24, 1
        %s231 = scalar_select %p230, %s24, 1
        %p232 = scmp.lt.s32.totalorder %s229, 1
        %s233 = scalar_select %p232, %s229, 1
        %s234 = smul.addr %s231, 2
        %s235 = sadd.s32 %s233, %s234
        %s236 = scalar_lea.vmem %s2, %s235
        %s237 = smul.u32 2, %s25
        %p238 = scmp.eq.s32.totalorder %s25, 0
        // Predicated region
        $region37: #{tpu_custom_call.1} parent=31 // pred_check
          %p239 = pneg %p238
        $region38: #{tpu_custom_call.1} parent=31 // pred_check_branch
          %241 = sbr.rel (%p239) target = $region40
        $region39: #{tpu_custom_call.1} parent=31 // pred_region
          %v242 = vlaneseq
          %vm243 = vcmp.ge.s32.totalorder %v242, 0
          %vm244 = vcmp.lt.s32.totalorder %v242, 256
          %vm245 = vmand %vm243, %vm244
          %246 = vst.msk [vmem:[#allocation2] sm:$0x3] %vm245, 0.0
        $region40: #{tpu_custom_call.1} parent=31 // pred_fallthru
          _
        %v247 = vld [vmem:[%s197] sm:$0xff]
        %v248 = vld [vmem:[%s236] sm:$0x3]
        %250 = vst [vmem:[#allocation1] ss:$2 sm:$0xff] %v247
        %v251 = vld.sshfl [vmem:[#allocation1] sm:$0xff pattern:$0x75316420]
        %v252 = vld.sshfl [vmem:[#allocation1 + $0x8] sm:$0xff pattern:$0x75316420]
        %vm255 = vcmask 1043456
        %v256 = vsel %vm255, %v251, -inf
        %v257 = vrot.slane %v256, 4
        %v258 = vmax.f32 %v256, %v257
        %v259 = vrot.slane %v258, 2
        %v260 = vmax.f32 %v258, %v259
        %v261 = vrot.slane %v260, 1
        %v262 = vmax.f32 %v260, %v261
        %v263 = vsel %vm255, %v252, -inf
        %v264 = vrot.slane %v263, 4
        %v265 = vmax.f32 %v263, %v264
        %v266 = vrot.slane %v265, 2
        %v267 = vmax.f32 %v265, %v266
        %v268 = vrot.slane %v267, 1
        %v269 = vmax.f32 %v267, %v268
        %v272 = vrot.slane %v269, 4
        %v273 = vsel %vm255, %v262, %v272
        %v275 = vsub.f32 %v247, %v273
        %v276 = vmul.f32 %v275, 1.442695
        %v277 = vpow.pop %v276
        %279 = vst [vmem:[#allocation1] ss:$2 sm:$0xff] %v277
        %v280 = vld.sshfl [vmem:[#allocation1] sm:$0xff pattern:$0x75316420]
        %v281 = vld.sshfl [vmem:[#allocation1 + $0x8] sm:$0xff pattern:$0x75316420]
        %v284 = vsel %vm255, %v280, 0.0
        %v285 = vrot.slane %v284, 4
        %v286 = vadd.f32 %v284, %v285
        %v287 = vrot.slane %v286, 2
        %v288 = vadd.f32 %v286, %v287
        %v289 = vrot.slane %v288, 1
        %v290 = vadd.f32 %v288, %v289
        %v291 = vsel %vm255, %v281, 0.0
        %v292 = vrot.slane %v291, 4
        %v293 = vadd.f32 %v291, %v292
        %v294 = vrot.slane %v293, 2
        %v295 = vadd.f32 %v293, %v294
        %v296 = vrot.slane %v295, 1
        %v297 = vadd.f32 %v295, %v296
        %v298 = vlog2.pop %v290
        %v299 = vmul.f32 %v298, 0.6931472
        %v300 = vlog2.pop %v297
        %v301 = vmul.f32 %v300, 0.6931472
        %v302 = vlaneseq
        %v303 = vshrl.u32 %v302, 7
        %v304 = vperm.slane %v248, 0
        %v305 = vperm.slane %v248, 1
        %vm306 = vcmp.eq.s32.totalorder %v303, %v304
        %vm307 = vcmp.eq.s32.totalorder %v303, %v305
        %v308 = vsel %vm306, 1, 0
        %v309 = vsel %vm307, 1, 0
        %v310 = vcvt.s32.f32 %v308
        %v311 = vcvt.s32.f32 %v309
        %v314 = vrot.slane %v311, 4
        %v315 = vsel %vm255, %v310, %v314
        %v317 = vmul.f32 %v275, %v315
        %319 = vst [vmem:[#allocation1] ss:$2 sm:$0xff] %v317
        %v320 = vld.sshfl [vmem:[#allocation1] sm:$0xff pattern:$0x75316420]
        %v321 = vld.sshfl [vmem:[#allocation1 + $0x8] sm:$0xff pattern:$0x75316420]
        %v324 = vsel %vm255, %v320, 0.0
        %v325 = vrot.slane %v324, 4
        %v326 = vadd.f32 %v324, %v325
        %v327 = vrot.slane %v326, 2
        %v328 = vadd.f32 %v326, %v327
        %v329 = vrot.slane %v328, 1
        %v330 = vadd.f32 %v328, %v329
        %v331 = vsel %vm255, %v321, 0.0
        %v332 = vrot.slane %v331, 4
        %v333 = vadd.f32 %v331, %v332
        %v334 = vrot.slane %v333, 2
        %v335 = vadd.f32 %v333, %v334
        %v336 = vrot.slane %v335, 1
        %v337 = vadd.f32 %v335, %v336
        %v338 = vsub.f32 %v330, %v299
        %v339 = vsub.f32 %v337, %v301
        %v340 = vmul.f32 %v338, 1.442695
        %v341 = vpow.pop %v340
        %v342 = vmul.f32 %v339, 1.442695
        %v343 = vpow.pop %v342
        %v344 = vld [vmem:[%s0] sm:$0xf]
        %346 = vset.pattern.permute.xlu0 0
        %347 = vperm.xlu0 %346, %v344
        %v348 = vpop.permute.xlu0 %347
        %v350 = vmul.f32 %v348, %v310
        %v351 = vmul.f32 %v348, %v311
        %v352 = vsel %vm255, %v350, 0.0
        %v353 = vrot.slane %v352, 4
        %v354 = vadd.f32 %v352, %v353
        %v355 = vrot.slane %v354, 2
        %v356 = vadd.f32 %v354, %v355
        %v357 = vrot.slane %v356, 1
        %v358 = vadd.f32 %v356, %v357
        %v359 = vsel %vm255, %v351, 0.0
        %v360 = vrot.slane %v359, 4
        %v361 = vadd.f32 %v359, %v360
        %v362 = vrot.slane %v361, 2
        %v363 = vadd.f32 %v361, %v362
        %v364 = vrot.slane %v363, 1
        %v365 = vadd.f32 %v363, %v364
        %v366 = vadd.f32 %v341, 1.0
        %v367 = vadd.f32 %v343, 1.0
        %v368 = vmul.f32 %v366, %v366
        %v369 = vmul.f32 %v367, %v367
        %v370 = vsub.f32 0.0, %v358
        %v371 = vsub.f32 0.0, %v365
        %v372 = vmul.f32 %v370, %v368
        %v373 = vmul.f32 %v371, %v369
        %v374 = vmul.f32 %v372, %v338
        %v375 = vmul.f32 %v373, %v339
        %v376 = vld [vmem:[#allocation2] sm:$0x3]
        %v379 = vrot.slane %v375, 7
        %vm380 = vcmask 1040384
        %v381 = vsel %vm380, %v374, %v379
        %v383 = vadd.f32 %v376, %v381
        %v384 = vlaneseq
        %vm385 = vcmp.ge.s32.totalorder %v384, 0
        %vm386 = vcmp.lt.s32.totalorder %v384, 256
        %vm387 = vmand %vm385, %vm386
        %388 = vst.msk [vmem:[#allocation2] sm:$0x3] %vm387, %v383
        // Predicated region
        $region41: #{tpu_custom_call.1} parent=31 // pred_check
          %p389 = pneg %p238
        $region42: #{tpu_custom_call.1} parent=31 // pred_check_branch
          %391 = sbr.rel (%p389) target = $region44
        $region43: #{tpu_custom_call.1} parent=31 // pred_region
          %v392 = vld [vmem:[#allocation2] sm:$0x3]
          %v394 = vperm.slane %v392, 0
          %v395 = vperm.slane %v392, 1
          %v398 = vsel %vm380, %v394, 0.0
          %v399 = vsel %vm380, %v395, 0.0
          %v400 = vadd.f32 %v398, %v399
          %401 = vadd.xlane.f32.xlu0 %v400
          %v402 = vpop.xlane.xlu0 %401
          %v403 = vrot.slane %v402, 4
          %v404 = vadd.f32 %v402, %v403
          %v405 = vrot.slane %v404, 2
          %v406 = vadd.f32 %v404, %v405
          %v407 = vrot.slane %v406, 1
          %v408 = vadd.f32 %v406, %v407
          %s409 = vtos %v408
          %v410 = vstv %s409
          %v411 = vadd.f32 %v410, 0.0
          %412 = vst [vmem:[%s227] sm:$0x1] %v411
        $region44: #{tpu_custom_call.1} parent=31 // pred_fallthru
          _
        %s413 = sand.u32 %s117, 1
        %s414 = scalar_lea.sflag [#allocation5], %s413
        %s415 = sand.u32 %s117, 1
        %s416 = scalar_lea.vmem [#allocation6], %s415
        // Predicated region
        $region45: #{tpu_custom_call.1} parent=31 // pred_check
          %p417 = pneg %p127
        $region46: #{tpu_custom_call.1} parent=31 // pred_check_branch
          %419 = sbr.rel (%p417) target = $region48
        $region47: #{tpu_custom_call.1} parent=31 // pred_region
          %421 = vsyncadd %s414, 0
          %s422 = scalar_lea.hbm %s3, %s24
          %s424 = sshll.u32 %s416, 4
          %s425 = int_to_ptr.vmem [resolvable:$true] %s424
          %s426 = sshll.u32 %s422, 4
          %s427 = int_to_ptr.hbm [resolvable:$true] %s426
          %429 = dma.vmem_to_hbm [thread:$0]  %s425, 16, %s427, %s414
        $region48: #{tpu_custom_call.1} parent=31 // pred_fallthru
          _
      $region32: #{tpu_custom_call.1} parent=5 // pred_fallthru
        _
      %p430 = scmp.le.s32.totalorder 2, %s15
      // Predicated region
      $region49: #{tpu_custom_call.1} parent=5 // pred_check
        %p431 = pneg %p430
      $region50: #{tpu_custom_call.1} parent=5 // pred_check_branch
        %433 = sbr.rel (%p431) target = $region52
      $region51: #{tpu_custom_call.1} parent=5 // pred_region
        %s434 = ssub.s32 %s15, 2
        // Predicated region
        $region53: #{tpu_custom_call.1} parent=51 // pred_check
          %p435 = pneg %p133
        $region54: #{tpu_custom_call.1} parent=51 // pred_check_branch
          %437 = sbr.rel (%p435) target = $region56
        $region55: #{tpu_custom_call.1} parent=51 // pred_region
          %s438 = sand.u32 %s118, 1
          %s439 = scalar_lea.sflag [#allocation5], %s438
          %s440 = sand.u32 %s118, 1
          %s441 = scalar_lea.vmem [#allocation6], %s440
          %443 = dma.done %s439, 16
        $region56: #{tpu_custom_call.1} parent=51 // pred_fallthru
          _
      $region52: #{tpu_custom_call.1} parent=5 // pred_fallthru
        _
    $region6: #{tpu_custom_call.1} parent=1 // loop_footer
      %s19 = sadd.s32 1, %s15
    $region7: #{tpu_custom_call.1} parent=1 // loop_footer_branch
      %14 = sbr.rel target = $region3
    $region8: #{tpu_custom_call.1} parent=1 // loop_exit
      _
    %444 = vsyncpa [#allocation4], 1
    %s445 = scalar_lea.sflag [#allocation4], 1
    %446 = vsyncpa %s445, 1
    %447 = vsyncpa [#allocation5], 1
    %s448 = scalar_lea.sflag [#allocation5], 1
    %449 = vsyncpa %s448, 1

</llo_original>
